<compile_context>
chip_gen: v6e
topology: v6e:2x2x1
jax: 0.10.0
libtpu: 0.0.40
codegen_flags: <defaults>
</compile_context>

<pallas_src>
import functools
from typing import NamedTuple

import jax
import jax.numpy as jnp
from jax.experimental import pallas as pl
from jax.experimental.pallas import tpu as pltpu


def _round_up(x, m):
    return (x + m - 1) // m * m


@functools.lru_cache(maxsize=None)
def _vmem_capacity_bytes():
    """Per-core VMEM capacity; conservative fallback if the query is unavailable."""
    try:
        return int(pltpu.get_tpu_info().vmem_capacity_bytes)
    except Exception:
        return 64 * 1024 * 1024  # v7x per-TC size — the safe lower bound


def _vmem_estimate(dp, ff_tile, tm):
    """Rough per-step VMEM footprint (double-buffered blocks + h intermediate)."""
    return (8 * dp * ff_tile          # W1 + W2 blocks, bf16, 2 buffers each
            + 12 * tm * dp            # x block (bf16 x2) + out block (f32 x2)
            + 6 * tm * ff_tile        # h intermediate: f32 + bf16 copy
            + 1024 * tm               # lane-padded gate column (tm,1)->(tm,128) f32 x2
            + 64 * (ff_tile + dp))    # sublane-padded biases


class MoEParams(NamedTuple):
    gate_w: jax.Array   # (d, E)        f32
    gate_b: jax.Array   # (E,)          f32
    w1: jax.Array       # (E, dp, ffp)  bf16
    b1: jax.Array       # (E, 1, ffp)   f32
    w2: jax.Array       # (E, ffp, dp)  bf16
    b2: jax.Array       # (E, 1, dp)    f32
    d: int
    dp: int
    ffp: int
    ff_tile: int
    tm: int
    vmem_limit: int


def prepare_moe_params(gate_w, gate_b, w1, b1, w2, b2, *, tm=None):
    """Pad + bf16-cast the expert weights ONCE (hoisted out of the forward path)
    and pick chip-aware tile sizes from the actual VMEM capacity."""
    E, d, ff = w1.shape
    dp = _round_up(d, 128)
    cap = _vmem_capacity_bytes()

    if tm is None:
        # Streamed weight chunks need tm >= ~680 (v6e) / ~310 (v7x) worth of rows
        # per weight byte to stay MXU-bound; pick per generation.
        tm = 768 if cap >= 96 * 1024 * 1024 else 512
    tm = max(16, _round_up(tm, 16))

    ffp0 = _round_up(ff, 128)
    budget = int(cap * 0.6)          # leave headroom for compiler scratch
    while True:
        nchunks = 1
        while True:
            ff_tile = _round_up(-(-ffp0 // nchunks), 128)
            need = _vmem_estimate(dp, ff_tile, tm)
            if need <= budget or ff_tile <= 256:
                break
            nchunks += 1
        if need <= budget or tm <= 256:
            break
        tm = max(256, _round_up(tm // 2, 16))
    ffp = ff_tile * nchunks

    # One-time padded / bf16 weight copies (lane-dense contraction + store dims).
    w1q = jnp.zeros((E, dp, ffp), jnp.bfloat16).at[:, :d, :ff].set(w1.astype(jnp.bfloat16))
    w2q = jnp.zeros((E, ffp, dp), jnp.bfloat16).at[:, :ff, :d].set(w2.astype(jnp.bfloat16))
    b1p = jnp.zeros((E, 1, ffp), jnp.float32).at[:, :, :ff].set(
        b1.reshape(E, 1, ff).astype(jnp.float32))
    b2p = jnp.zeros((E, 1, dp), jnp.float32).at[:, :, :d].set(
        b2.reshape(E, 1, d).astype(jnp.float32))

    vmem_limit = int(max(32 * 1024 * 1024,
                         min(int(cap * 0.8), cap - 8 * 1024 * 1024)))

    return MoEParams(gate_w.astype(jnp.float32), gate_b.astype(jnp.float32),
                     w1q, b1p, w2q, b2p, d, dp, ffp, ff_tile, tm, vmem_limit)


def _moe_group_kernel(be_ref, x_ref, g_ref, w1_ref, b1_ref, w2_ref, b2_ref, o_ref):
    """One (assignment_block, ff_chunk) grid step for this block's expert.

    The f32 output block (constant index along the ff axis -> VMEM-resident)
    accumulates relu(x @ W1[:, chunk] + b1[chunk]) @ W2[chunk, :]; on the last
    chunk it is scaled by the per-assignment gate (+ gate * b2).
    """
    f = pl.program_id(1)

    @pl.when(f == 0)
    def _():
        o_ref[...] = jnp.zeros_like(o_ref)

    x = x_ref[...]                                                # (tm, dp) bf16
    h = jnp.dot(x, w1_ref[0], preferred_element_type=jnp.float32) + b1_ref[0]
    h = jnp.maximum(h, 0.0)                                       # ReLU (Dropout = identity)
    o_ref[...] += jnp.dot(h.astype(x.dtype), w2_ref[0],
                          preferred_element_type=jnp.float32)     # (tm, dp) f32

    @pl.when(f == pl.num_programs(1) - 1)
    def _():
        o_ref[...] = g_ref[...] * (o_ref[...] + b2_ref[0])


@functools.partial(jax.jit, static_argnames=("ff_tile", "tm", "vmem_limit"))
def _moe_forward(x, gate_w, gate_b, w1q, b1p, w2q, b2p, *, ff_tile, tm, vmem_limit):
    B, T, d = x.shape
    E, dp, ffp = w1q.shape
    N = B * T
    A = 2 * N                                                  # total (token, rank) assignments
    xf = x.reshape(N, d)

    # ---- gating: tiny d x E matmul + softmax + top-2 (plain-JAX glue, f32) ----
    logits = xf.astype(jnp.float32) @ gate_w + gate_b          # (N, E)
    scores = jax.nn.softmax(logits, axis=-1)
    top2_s, top2_i = jax.lax.top_k(scores, 2)                  # (N, 2) each
    # Raw (un-renormalized) top-2 softmax scores — matches the PyTorch module.

    # ---- grouped top-2 routing: bucket assignments by expert ------------------
    e_flat = top2_i.reshape(-1).astype(jnp.int32)              # (2N,)
    g_flat = top2_s.reshape(-1).astype(jnp.float32)            # (2N,)
    t_flat = jnp.repeat(jnp.arange(N, dtype=jnp.int32), 2)     # (2N,) owning token

    tm_eff = min(tm, _round_up(A, 16))
    counts = jnp.bincount(e_flat, length=E)                    # per-expert assignment count
    pcounts = ((counts + tm_eff - 1) // tm_eff) * tm_eff       # tile-padded per expert
    poff = jnp.concatenate([jnp.zeros((1,), pcounts.dtype), jnp.cumsum(pcounts)[:-1]])
    coff = jnp.concatenate([jnp.zeros((1,), counts.dtype), jnp.cumsum(counts)[:-1]])

    order = jnp.argsort(e_flat)                                # group assignments by expert
    e_sorted = e_flat[order]
    pos_in_expert = jnp.arange(A, dtype=jnp.int32) - coff[e_sorted].astype(jnp.int32)
    dest = poff[e_sorted].astype(jnp.int32) + pos_in_expert    # unique padded slot / assignment

    A_pad = _round_up(A, tm_eff) + E * tm_eff                  # static bound on padded slots
    slot_token = jnp.zeros((A_pad,), jnp.int32).at[dest].set(t_flat[order])
    slot_gate = jnp.zeros((A_pad,), jnp.float32).at[dest].set(g_flat[order]).reshape(A_pad, 1)

    num_blocks = A_pad // tm_eff
    block_start = jnp.arange(num_blocks, dtype=poff.dtype) * tm_eff
    block_expert = jnp.clip(jnp.searchsorted(poff, block_start, side="right") - 1,
                            0, E - 1).astype(jnp.int32)        # expert id per block (SMEM prefetch)

    # ---- gather routed tokens (bf16, lane-padded) ------------------------------
    xfp = jnp.zeros((N, dp), jnp.bfloat16).at[:, :d].set(xf.astype(jnp.bfloat16))
    xq = jnp.take(xfp, slot_token, axis=0)                     # (A_pad, dp)

    nf = ffp // ff_tile
    y = pl.pallas_call(
        _moe_group_kernel,
        out_shape=jax.ShapeDtypeStruct((A_pad, dp), jnp.float32),
        grid_spec=pltpu.PrefetchScalarGridSpec(
            num_scalar_prefetch=1,
            grid=(num_blocks, nf),                             # (assignment blocks, ff chunks)
            in_specs=[
                pl.BlockSpec((tm_eff, dp), lambda i, f, be: (i, 0)),             # routed x
                pl.BlockSpec((tm_eff, 1), lambda i, f, be: (i, 0)),              # gate column
                pl.BlockSpec((1, dp, ff_tile), lambda i, f, be: (be[i], 0, f)),  # W1 chunk
                pl.BlockSpec((1, 1, ff_tile), lambda i, f, be: (be[i], 0, f)),   # b1 chunk
                pl.BlockSpec((1, ff_tile, dp), lambda i, f, be: (be[i], f, 0)),  # W2 chunk
                pl.BlockSpec((1, 1, dp), lambda i, f, be: (be[i], 0, 0)),        # b2
            ],
            out_specs=pl.BlockSpec((tm_eff, dp), lambda i, f, be: (i, 0)),
        ),
        compiler_params=pltpu.CompilerParams(
            dimension_semantics=("parallel", "arbitrary"),
            vmem_limit_bytes=vmem_limit),
    )(block_expert, xq, slot_gate, w1q, b1p, w2q, b2p)

    # ---- combine: each token has exactly 2 routed slots -> two gathers + add ---
    inv_slot = jnp.zeros((A,), jnp.int32).at[order].set(dest)  # slot of each original assignment
    token_slots = inv_slot.reshape(N, 2)
    out = (jnp.take(y, token_slots[:, 0], axis=0)[:, :d]
           + jnp.take(y, token_slots[:, 1], axis=0)[:, :d])
    return out.astype(x.dtype).reshape(B, T, d)


def moe_feedforward_top2(x, params: MoEParams):
    """x: (B, T, d) float32.  Returns (B, T, d)."""
    return _moe_forward(x, params.gate_w, params.gate_b,
                        params.w1, params.b1, params.w2, params.b2,
                        ff_tile=params.ff_tile, tm=params.tm,
                        vmem_limit=params.vmem_limit)


def _reference(x, gate_w, gate_b, w1, b1, w2, b2):
    """Pure-JAX f32 reference mirroring the PyTorch forward (eval mode)."""
    B, T, d = x.shape
    E = w1.shape[0]
    xf = x.reshape(-1, d)
    logits = xf @ gate_w + gate_b
    scores = jax.nn.softmax(logits, axis=-1)
    top2_s, top2_i = jax.lax.top_k(scores, 2)
    wdense = (jax.nn.one_hot(top2_i[:, 0], E, dtype=scores.dtype) * top2_s[:, 0:1]
              + jax.nn.one_hot(top2_i[:, 1], E, dtype=scores.dtype) * top2_s[:, 1:2])
    out = jnp.zeros_like(xf)
    for e in range(E):
        h = jnp.maximum(xf @ w1[e] + b1[e, 0], 0.0)
        y = h @ w2[e] + b2[e, 0]
        out = out + wdense[:, e:e + 1] * y
    return out.reshape(B, T, d)


def _run_case(B, T, d_model, dim_feedforward, num_experts, tm, seed):
    key = jax.random.PRNGKey(seed)
    k = jax.random.split(key, 7)
    scale = 0.05
    x = jax.random.normal(k[0], (B, T, d_model), dtype=jnp.float32)
    gate_w = scale * jax.random.normal(k[1], (d_model, num_experts), dtype=jnp.float32)
    gate_b = scale * jax.random.normal(k[2], (num_experts,), dtype=jnp.float32)
    w1 = scale * jax.random.normal(k[3], (num_experts, d_model, dim_feedforward), dtype=jnp.float32)
    b1 = scale * jax.random.normal(k[4], (num_experts, 1, dim_feedforward), dtype=jnp.float32)
    w2 = scale * jax.random.normal(k[5], (num_experts, dim_feedforward, d_model), dtype=jnp.float32)
    b2 = scale * jax.random.normal(k[6], (num_experts, 1, d_model), dtype=jnp.float32)

    params = prepare_moe_params(gate_w, gate_b, w1, b1, w2, b2, tm=tm)  # one-time weight prep
    out = moe_feedforward_top2(x, params)
    out = jax.block_until_ready(out)

    ref = _reference(x, gate_w, gate_b, w1, b1, w2, b2)
    assert out.shape == (B, T, d_model)
    # bf16 MXU inputs (f32 accumulation) -> loosened tolerance vs the f32 reference.
    assert jnp.allclose(out, ref, atol=2e-2, rtol=2e-2), (
        f"mismatch vs reference: max abs err {jnp.max(jnp.abs(out - ref))}")


if __name__ == "__main__":
    # Small shapes consistent with the module's forward (chip-default tm).
    _run_case(B=2, T=8, d_model=32, dim_feedforward=64, num_experts=4, tm=None, seed=0)
    # Ragged token count (exercises padding + multiple routed blocks per expert).
    _run_case(B=3, T=70, d_model=48, dim_feedforward=96, num_experts=4, tm=64, seed=1)
    print("KERNEL_OK")
</pallas_src>

<mosaic_0001>
module attributes {stable_mosaic.version = 11 : i64} {
  func.func private @main(%arg0: i32) attributes {dimension_semantics = [#tpu.dimension_semantics<core_parallel>], iteration_bounds = array<i64: 2>, tpu.core_type = #tpu.core_type<sc_scalar_subcore>, window_params = []} {
    return
  }
}

module attributes {stable_mosaic.version = 11 : i64} {
  func.func private @main(%arg0: i32) attributes {dimension_semantics = [#tpu.dimension_semantics<core_parallel>], iteration_bounds = array<i64: 2>, tpu.core_type = #tpu.core_type<sc_scalar_subcore>, window_params = []} {
    return
  }
}

module attributes {stable_mosaic.version = 11 : i64} {
  func.func @_moe_group_kernel(%arg0: i32, %arg1: i32, %arg2: memref<5xi32, #tpu.memory_space<smem>>, %arg3: memref<32x128xbf16, #tpu.memory_space<vmem>>, %arg4: memref<32x1xf32, #tpu.memory_space<vmem>>, %arg5: memref<1x128x128xbf16, #tpu.memory_space<vmem>>, %arg6: memref<1x1x128xf32, #tpu.memory_space<vmem>>, %arg7: memref<1x128x128xbf16, #tpu.memory_space<vmem>>, %arg8: memref<1x1x128xf32, #tpu.memory_space<vmem>>, %arg9: memref<32x128xf32, #tpu.memory_space<vmem>>) attributes {dimension_semantics = [#tpu.dimension_semantics<parallel>, #tpu.dimension_semantics<arbitrary>], iteration_bounds = array<i64: 5, 1>, scalar_prefetch = 1 : i64, scratch_operands = 0 : i64, tpu.core_type = #tpu.core_type<tc>, window_params = [{transform_indices = @transform_0, window_bounds = array<i64: 32, 128>}, {transform_indices = @transform_1, window_bounds = array<i64: 32, 1>}, {transform_indices = @transform_2, window_bounds = array<i64: 1, 128, 128>}, {transform_indices = @transform_3, window_bounds = array<i64: 1, 1, 128>}, {transform_indices = @transform_4, window_bounds = array<i64: 1, 128, 128>}, {transform_indices = @transform_5, window_bounds = array<i64: 1, 1, 128>}, {transform_indices = @transform_6, window_bounds = array<i64: 32, 128>}]} {
    %c0_i32 = arith.constant 0 : i32
    %0 = arith.cmpi eq, %arg1, %c0_i32 : i32
    %1 = arith.extui %0 : i1 to i32
    %c0_i32_0 = arith.constant 0 : i32
    %2 = arith.cmpi ne, %1, %c0_i32_0 : i32
    scf.if %2 {
      %cst_19 = arith.constant 0.000000e+00 : f32
      %23 = vector.broadcast %cst_19 : f32 to vector<32x128xf32>
      %c0_20 = arith.constant 0 : index
      %c0_21 = arith.constant 0 : index
      %24 = vector.load %arg9[%c0_20, %c0_21] : memref<32x128xf32, #tpu.memory_space<vmem>>, vector<32x128xf32>
      tpu.vector_store %arg9[%c0_20, %c0_21], %23 {strides = array<i32>} : memref<32x128xf32, #tpu.memory_space<vmem>>, vector<32x128xf32>,
    } else {
    }
    %c0 = arith.constant 0 : index
    %c0_1 = arith.constant 0 : index
    %3 = vector.load %arg3[%c0, %c0_1] : memref<32x128xbf16, #tpu.memory_space<vmem>>, vector<32x128xbf16>
    %c0_2 = arith.constant 0 : index
    %c0_3 = arith.constant 0 : index
    %c0_4 = arith.constant 0 : index
    %4 = vector.load %arg5[%c0_2, %c0_3, %c0_4] : memref<1x128x128xbf16, #tpu.memory_space<vmem>>, vector<1x128x128xbf16>
    %5 = vector.shape_cast %4 : vector<1x128x128xbf16> to vector<128x128xbf16>
    %cst = arith.constant dense<0.000000e+00> : vector<32x128xf32>
    %6 = tpu.matmul %3, %5, %cst {dimension_numbers = #tpu.dot_dimension_numbers<[1], [0], [0], [1], [0, 0, 1, 1], [], []>} : vector<32x128xbf16>, vector<128x128xbf16>, vector<32x128xf32> -> vector<32x128xf32>
    %c0_5 = arith.constant 0 : index
    %c0_6 = arith.constant 0 : index
    %c0_7 = arith.constant 0 : index
    %7 = vector.load %arg6[%c0_5, %c0_6, %c0_7] : memref<1x1x128xf32, #tpu.memory_space<vmem>>, vector<1x1x128xf32>
    %8 = vector.shape_cast %7 : vector<1x1x128xf32> to vector<1x128xf32>
    %9 = vector.broadcast %8 : vector<1x128xf32> to vector<32x128xf32>
    %10 = arith.addf %6, %9 : vector<32x128xf32>
    %cst_8 = arith.constant 0.000000e+00 : f32
    %11 = vector.broadcast %cst_8 : f32 to vector<32x128xf32>
    %12 = arith.maximumf %10, %11 : vector<32x128xf32>
    %c0_9 = arith.constant 0 : index
    %c0_10 = arith.constant 0 : index
    %13 = vector.load %arg9[%c0_9, %c0_10] : memref<32x128xf32, #tpu.memory_space<vmem>>, vector<32x128xf32>
    %14 = arith.truncf %12 : vector<32x128xf32> to vector<32x128xbf16>
    %c0_11 = arith.constant 0 : index
    %c0_12 = arith.constant 0 : index
    %c0_13 = arith.constant 0 : index
    %15 = vector.load %arg7[%c0_11, %c0_12, %c0_13] : memref<1x128x128xbf16, #tpu.memory_space<vmem>>, vector<1x128x128xbf16>
    %16 = vector.shape_cast %15 : vector<1x128x128xbf16> to vector<128x128xbf16>
    %cst_14 = arith.constant dense<0.000000e+00> : vector<32x128xf32>
    %17 = tpu.matmul %14, %16, %cst_14 {dimension_numbers = #tpu.dot_dimension_numbers<[1], [0], [0], [1], [0, 0, 1, 1], [], []>} : vector<32x128xbf16>, vector<128x128xbf16>, vector<32x128xf32> -> vector<32x128xf32>
    %18 = arith.addf %13, %17 : vector<32x128xf32>
    %c0_15 = arith.constant 0 : index
    %c0_16 = arith.constant 0 : index
    %19 = vector.load %arg9[%c0_15, %c0_16] : memref<32x128xf32, #tpu.memory_space<vmem>>, vector<32x128xf32>
    tpu.vector_store %arg9[%c0_15, %c0_16], %18 {strides = array<i32>} : memref<32x128xf32, #tpu.memory_space<vmem>>, vector<32x128xf32>,
    %c0_i32_17 = arith.constant 0 : i32
    %20 = arith.cmpi eq, %arg1, %c0_i32_17 : i32
    %21 = arith.extui %20 : i1 to i32
    %c0_i32_18 = arith.constant 0 : i32
    %22 = arith.cmpi ne, %21, %c0_i32_18 : i32
    scf.if %22 {
      %c0_19 = arith.constant 0 : index
      %c0_20 = arith.constant 0 : index
      %23 = vector.load %arg4[%c0_19, %c0_20] : memref<32x1xf32, #tpu.memory_space<vmem>>, vector<32x1xf32>
      %c0_21 = arith.constant 0 : index
      %c0_22 = arith.constant 0 : index
      %24 = vector.load %arg9[%c0_21, %c0_22] : memref<32x128xf32, #tpu.memory_space<vmem>>, vector<32x128xf32>
      %c0_23 = arith.constant 0 : index
      %c0_24 = arith.constant 0 : index
      %c0_25 = arith.constant 0 : index
      %25 = vector.load %arg8[%c0_23, %c0_24, %c0_25] : memref<1x1x128xf32, #tpu.memory_space<vmem>>, vector<1x1x128xf32>
      %26 = vector.shape_cast %25 : vector<1x1x128xf32> to vector<1x128xf32>
      %27 = vector.broadcast %26 : vector<1x128xf32> to vector<32x128xf32>
      %28 = arith.addf %24, %27 : vector<32x128xf32>
      %29 = vector.broadcast %23 : vector<32x1xf32> to vector<32x128xf32>
      %30 = arith.mulf %29, %28 : vector<32x128xf32>
      %c0_26 = arith.constant 0 : index
      %c0_27 = arith.constant 0 : index
      %31 = vector.load %arg9[%c0_26, %c0_27] : memref<32x128xf32, #tpu.memory_space<vmem>>, vector<32x128xf32>
      tpu.vector_store %arg9[%c0_26, %c0_27], %30 {strides = array<i32>} : memref<32x128xf32, #tpu.memory_space<vmem>>, vector<32x128xf32>,
    } else {
    }
    return
  }
  func.func @transform_0(%arg0: i32, %arg1: i32, %arg2: memref<5xi32, #tpu.memory_space<smem>>) -> (i32, i32) {
    %c0_i32 = arith.constant 0 : i32
    %c0_i32_0 = arith.constant 0 : i32
    return %arg0, %c0_i32 : i32, i32
  }
  func.func @transform_1(%arg0: i32, %arg1: i32, %arg2: memref<5xi32, #tpu.memory_space<smem>>) -> (i32, i32) {
    %c0_i32 = arith.constant 0 : i32
    %c0_i32_0 = arith.constant 0 : i32
    return %arg0, %c0_i32 : i32, i32
  }
  func.func @transform_2(%arg0: i32, %arg1: i32, %arg2: memref<5xi32, #tpu.memory_space<smem>>) -> (i32, i32, i32) {
    %0 = arith.index_cast %arg0 : i32 to index
    %1 = memref.load %arg2[%0] : memref<5xi32, #tpu.memory_space<smem>>
    %c0_i32 = arith.constant 0 : i32
    %c0_i32_0 = arith.constant 0 : i32
    return %1, %c0_i32, %arg1 : i32, i32, i32
  }
  func.func @transform_3(%arg0: i32, %arg1: i32, %arg2: memref<5xi32, #tpu.memory_space<smem>>) -> (i32, i32, i32) {
    %0 = arith.index_cast %arg0 : i32 to index
    %1 = memref.load %arg2[%0] : memref<5xi32, #tpu.memory_space<smem>>
    %c0_i32 = arith.constant 0 : i32
    %c0_i32_0 = arith.constant 0 : i32
    return %1, %c0_i32, %arg1 : i32, i32, i32
  }
  func.func @transform_4(%arg0: i32, %arg1: i32, %arg2: memref<5xi32, #tpu.memory_space<smem>>) -> (i32, i32, i32) {
    %0 = arith.index_cast %arg0 : i32 to index
    %1 = memref.load %arg2[%0] : memref<5xi32, #tpu.memory_space<smem>>
    %c0_i32 = arith.constant 0 : i32
    %c0_i32_0 = arith.constant 0 : i32
    return %1, %arg1, %c0_i32 : i32, i32, i32
  }
  func.func @transform_5(%arg0: i32, %arg1: i32, %arg2: memref<5xi32, #tpu.memory_space<smem>>) -> (i32, i32, i32) {
    %0 = arith.index_cast %arg0 : i32 to index
    %1 = memref.load %arg2[%0] : memref<5xi32, #tpu.memory_space<smem>>
    %c0_i32 = arith.constant 0 : i32
    %c0_i32_0 = arith.constant 0 : i32
    %c0_i32_1 = arith.constant 0 : i32
    return %1, %c0_i32, %c0_i32_0 : i32, i32, i32
  }
  func.func @transform_6(%arg0: i32, %arg1: i32, %arg2: memref<5xi32, #tpu.memory_space<smem>>) -> (i32, i32) {
    %c0_i32 = arith.constant 0 : i32
    %c0_i32_0 = arith.constant 0 : i32
    return %arg0, %c0_i32 : i32, i32
  }
}

</mosaic_0001>

<llo_original>
// kernel: custom-call
$region0: #{custom-call}
  %s0 = inlined_call_operand.vmem [shape: u32[5], index: 0, kind: output, shape index: {}]

// kernel: _moe_forward.1
$region0: #{_moe_forward.1}
  #allocation0 [shape = 'u32[]', space=smem, size = 0x4, offset = 0x4, fixed_abs, tag = 'smem constant byte address 0x4 - core index']
  #allocation1 [shape = 'u32[144,128]{1,0:T(1,128)}', space=vmem, size = 0x12000, scoped, tag = 'internal scratch']
  #allocation2 [shape = 's32[1]{0}', space=sflag, size = 0x4, scoped, tag = 'scoped memory for _moe_forward.1']
  #allocation3 [shape = 'u8[512]{0}', space=smem, size = 0x200, scoped, tag = 'prefetched SMEM operand 0']
  %s0 = inlined_call_operand.vmem [shape: s32[5], index: 0, kind: input, shape index: {}]
  %s1 = inlined_call_operand.vmem [shape: bf16[160,128], index: 1, kind: input, shape index: {}]
  %s2 = inlined_call_operand.vmem [shape: f32[160,1], index: 2, kind: input, shape index: {}]
  %s3 = inlined_call_operand.vmem [shape: bf16[4,128,128], index: 3, kind: input, shape index: {}]
  %s4 = inlined_call_operand.vmem [shape: f32[4,1,128], index: 4, kind: input, shape index: {}]
  %s5 = inlined_call_operand.vmem [shape: bf16[4,128,128], index: 5, kind: input, shape index: {}]
  %s6 = inlined_call_operand.vmem [shape: f32[4,1,128], index: 6, kind: input, shape index: {}]
  %s7 = inlined_call_operand.vmem [shape: f32[160,128], index: 7, kind: output, shape index: {}]
  %s8 = sld [smem:[#allocation0]]
  $region65: #{_moe_forward.1} parent=0
    _
  %s10 = ssub.s32 1, %s8
  %s11 = scalar_select 0, %s10, %s8
  %s12 = sshll.u32 %s0, 4
  %s13 = int_to_ptr.vmem [resolvable:$true] %s12
  %15 = dma.vmem_to_smem %s13, 16, [#allocation3], [#allocation2]
  %16 = dma.done [#allocation2], 16
  %17 = sfence
  loop: start=0, step=1, limit=7
  $region2: #{_moe_forward.1} parent=0 // loop_pre_header
    _
  $region3: #{_moe_forward.1} parent=0 // loop_header
    %s19 = sphi 0, %s23
    %p20 = scmp.ge.s32.totalorder %s19, 7
    %s26 = sphi 0, %s38
    %s27 = sphi 0, %s34
    %s28 = sphi 0, %s26
    %s29 = sphi 0, %s27
    %s30 = sphi 0, %s28
    %s31 = sphi 0, %s29
    %s41 = sphi 0, %s43
    %s44 = sphi 0, %s41
    %s45 = sphi 0, %s44
    %s61 = sphi 0, %s45
    %s67 = sphi 0, %s69
    %s70 = sphi 0, %s67
    %s71 = sphi 0, %s70
    %s87 = sphi 0, %s71
    %s97 = sphi 0, %s99
    %s100 = sphi 0, %s97
    %s101 = sphi 0, %s100
    %s117 = sphi 0, %s101
    %s127 = sphi 0, %s129
    %s130 = sphi 0, %s127
    %s131 = sphi 0, %s130
    %s147 = sphi 0, %s131
    %s157 = sphi 0, %s159
    %s160 = sphi 0, %s157
    %s161 = sphi 0, %s160
    %s177 = sphi 0, %s161
    %s185 = sphi 0, %s187
    %s188 = sphi 0, %s185
    %s189 = sphi 0, %s188
    %s205 = sphi 0, %s189
    %s211 = sphi 0, %s213
    %s214 = sphi 0, %s211
    %s215 = sphi 0, %s214
    %s231 = sphi 0, %s215
  $region4: #{_moe_forward.1} parent=0 // loop_header_branch
    %22 = sbr.rel (%p20) target = $region8
  $region5: #{_moe_forward.1} parent=0 // loop_body
    %s24 = ssub.s32 %s19, 1
    %s25 = ssub.s32 %s19, 2
    %s32 = sadd.s32 1, %s27
    %p33 = scmp.ge.s32.totalorder %s32, 1
    %s34 = scalar_select %p33, 0, %s32
    %s35 = sadd.s32 1, %s26
    %s36 = scalar_select %p33, %s35, %s26
    %p37 = scmp.ge.s32.totalorder %s36, 5
    %s38 = scalar_select %p37, 0, %s36
    %s39 = ssub.s32 %s26, %s38
    %p40 = scmp.eq.s32.totalorder %s39, 0
    %s42 = sadd.s32 %s41, 1
    %s43 = scalar_select %p40, %s41, %s42
    %p46 = pneg %p40
    %p47 = scmp.eq.s32.totalorder %s19, 4
    %p48 = por %p46, %p47
    %p49 = scmp.ne.s32.totalorder %s41, %s44
    %p50 = scmp.eq.s32.totalorder %s19, 0
    %p51 = por %p49, %p50
    %p52 = scmp.ne.s32.totalorder %s41, %s44
    %p53 = scmp.eq.s32.totalorder %s24, 4
    %p54 = por %p52, %p53
    %p55 = scmp.ne.s32.totalorder %s44, %s45
    %p56 = scmp.eq.s32.totalorder %s24, 0
    %p57 = por %p55, %p56
    %p58 = scmp.ne.s32.totalorder %s44, %s45
    %p59 = scmp.eq.s32.totalorder %s25, 4
    %p60 = por %p58, %p59
    %p62 = scmp.ne.s32.totalorder %s45, %s61
    %p63 = scmp.eq.s32.totalorder %s25, 0
    %p64 = por %p62, %p63
    %s65 = ssub.s32 %s26, %s38
    %p66 = scmp.eq.s32.totalorder %s65, 0
    %s68 = sadd.s32 %s67, 1
    %s69 = scalar_select %p66, %s67, %s68
    %p72 = pneg %p66
    %p73 = scmp.eq.s32.totalorder %s19, 4
    %p74 = por %p72, %p73
    %p75 = scmp.ne.s32.totalorder %s67, %s70
    %p76 = scmp.eq.s32.totalorder %s19, 0
    %p77 = por %p75, %p76
    %p78 = scmp.ne.s32.totalorder %s67, %s70
    %p79 = scmp.eq.s32.totalorder %s24, 4
    %p80 = por %p78, %p79
    %p81 = scmp.ne.s32.totalorder %s70, %s71
    %p82 = scmp.eq.s32.totalorder %s24, 0
    %p83 = por %p81, %p82
    %p84 = scmp.ne.s32.totalorder %s70, %s71
    %p85 = scmp.eq.s32.totalorder %s25, 4
    %p86 = por %p84, %p85
    %p88 = scmp.ne.s32.totalorder %s71, %s87
    %p89 = scmp.eq.s32.totalorder %s25, 0
    %p90 = por %p88, %p89
    %s91 = sld [smem:[#allocation3 + %s26]]
    %s92 = sld [smem:[#allocation3 + %s38]]
    %s93 = ssub.s32 %s91, %s92
    %s94 = ssub.s32 %s27, %s34
    %s95 = sor.u32 %s93, %s94
    %p96 = scmp.eq.s32.totalorder %s95, 0
    %s98 = sadd.s32 %s97, 1
    %s99 = scalar_select %p96, %s97, %s98
    %p102 = pneg %p96
    %p103 = scmp.eq.s32.totalorder %s19, 4
    %p104 = por %p102, %p103
    %p105 = scmp.ne.s32.totalorder %s97, %s100
    %p106 = scmp.eq.s32.totalorder %s19, 0
    %p107 = por %p105, %p106
    %p108 = scmp.ne.s32.totalorder %s97, %s100
    %p109 = scmp.eq.s32.totalorder %s24, 4
    %p110 = por %p108, %p109
    %p111 = scmp.ne.s32.totalorder %s100, %s101
    %p112 = scmp.eq.s32.totalorder %s24, 0
    %p113 = por %p111, %p112
    %p114 = scmp.ne.s32.totalorder %s100, %s101
    %p115 = scmp.eq.s32.totalorder %s25, 4
    %p116 = por %p114, %p115
    %p118 = scmp.ne.s32.totalorder %s101, %s117
    %p119 = scmp.eq.s32.totalorder %s25, 0
    %p120 = por %p118, %p119
    %s121 = sld [smem:[#allocation3 + %s26]]
    %s122 = sld [smem:[#allocation3 + %s38]]
    %s123 = ssub.s32 %s121, %s122
    %s124 = ssub.s32 %s27, %s34
    %s125 = sor.u32 %s123, %s124
    %p126 = scmp.eq.s32.totalorder %s125, 0
    %s128 = sadd.s32 %s127, 1
    %s129 = scalar_select %p126, %s127, %s128
    %p132 = pneg %p126
    %p133 = scmp.eq.s32.totalorder %s19, 4
    %p134 = por %p132, %p133
    %p135 = scmp.ne.s32.totalorder %s127, %s130
    %p136 = scmp.eq.s32.totalorder %s19, 0
    %p137 = por %p135, %p136
    %p138 = scmp.ne.s32.totalorder %s127, %s130
    %p139 = scmp.eq.s32.totalorder %s24, 4
    %p140 = por %p138, %p139
    %p141 = scmp.ne.s32.totalorder %s130, %s131
    %p142 = scmp.eq.s32.totalorder %s24, 0
    %p143 = por %p141, %p142
    %p144 = scmp.ne.s32.totalorder %s130, %s131
    %p145 = scmp.eq.s32.totalorder %s25, 4
    %p146 = por %p144, %p145
    %p148 = scmp.ne.s32.totalorder %s131, %s147
    %p149 = scmp.eq.s32.totalorder %s25, 0
    %p150 = por %p148, %p149
    %s151 = sld [smem:[#allocation3 + %s26]]
    %s152 = sld [smem:[#allocation3 + %s38]]
    %s153 = ssub.s32 %s151, %s152
    %s154 = ssub.s32 %s27, %s34
    %s155 = sor.u32 %s153, %s154
    %p156 = scmp.eq.s32.totalorder %s155, 0
    %s158 = sadd.s32 %s157, 1
    %s159 = scalar_select %p156, %s157, %s158
    %p162 = pneg %p156
    %p163 = scmp.eq.s32.totalorder %s19, 4
    %p164 = por %p162, %p163
    %p165 = scmp.ne.s32.totalorder %s157, %s160
    %p166 = scmp.eq.s32.totalorder %s19, 0
    %p167 = por %p165, %p166
    %p168 = scmp.ne.s32.totalorder %s157, %s160
    %p169 = scmp.eq.s32.totalorder %s24, 4
    %p170 = por %p168, %p169
    %p171 = scmp.ne.s32.totalorder %s160, %s161
    %p172 = scmp.eq.s32.totalorder %s24, 0
    %p173 = por %p171, %p172
    %p174 = scmp.ne.s32.totalorder %s160, %s161
    %p175 = scmp.eq.s32.totalorder %s25, 4
    %p176 = por %p174, %p175
    %p178 = scmp.ne.s32.totalorder %s161, %s177
    %p179 = scmp.eq.s32.totalorder %s25, 0
    %p180 = por %p178, %p179
    %s181 = sld [smem:[#allocation3 + %s26]]
    %s182 = sld [smem:[#allocation3 + %s38]]
    %s183 = ssub.s32 %s181, %s182
    %p184 = scmp.eq.s32.totalorder %s183, 0
    %s186 = sadd.s32 %s185, 1
    %s187 = scalar_select %p184, %s185, %s186
    %p190 = pneg %p184
    %p191 = scmp.eq.s32.totalorder %s19, 4
    %p192 = por %p190, %p191
    %p193 = scmp.ne.s32.totalorder %s185, %s188
    %p194 = scmp.eq.s32.totalorder %s19, 0
    %p195 = por %p193, %p194
    %p196 = scmp.ne.s32.totalorder %s185, %s188
    %p197 = scmp.eq.s32.totalorder %s24, 4
    %p198 = por %p196, %p197
    %p199 = scmp.ne.s32.totalorder %s188, %s189
    %p200 = scmp.eq.s32.totalorder %s24, 0
    %p201 = por %p199, %p200
    %p202 = scmp.ne.s32.totalorder %s188, %s189
    %p203 = scmp.eq.s32.totalorder %s25, 4
    %p204 = por %p202, %p203
    %p206 = scmp.ne.s32.totalorder %s189, %s205
    %p207 = scmp.eq.s32.totalorder %s25, 0
    %p208 = por %p206, %p207
    %s209 = ssub.s32 %s26, %s38
    %p210 = scmp.eq.s32.totalorder %s209, 0
    %s212 = sadd.s32 %s211, 1
    %s213 = scalar_select %p210, %s211, %s212
    %p216 = pneg %p210
    %p217 = scmp.eq.s32.totalorder %s19, 4
    %p218 = por %p216, %p217
    %p219 = scmp.ne.s32.totalorder %s211, %s214
    %p220 = scmp.eq.s32.totalorder %s19, 0
    %p221 = por %p219, %p220
    %p222 = scmp.ne.s32.totalorder %s211, %s214
    %p223 = scmp.eq.s32.totalorder %s24, 4
    %p224 = por %p222, %p223
    %p225 = scmp.ne.s32.totalorder %s214, %s215
    %p226 = scmp.eq.s32.totalorder %s24, 0
    %p227 = por %p225, %p226
    %p228 = scmp.ne.s32.totalorder %s214, %s215
    %p229 = scmp.eq.s32.totalorder %s25, 4
    %p230 = por %p228, %p229
    %p232 = scmp.ne.s32.totalorder %s215, %s231
    %p233 = scmp.eq.s32.totalorder %s25, 0
    %p234 = por %p232, %p233
    %p235 = scmp.le.s32.totalorder 1, %s19
    %p236 = scmp.lt.s32.totalorder %s19, 6
    %p237 = pnand %p235, %p236
    %p238 = pneg %p237
    // Predicated region
    $region9: #{_moe_forward.1} parent=5 // pred_check
      _
    $region10: #{_moe_forward.1} parent=5 // pred_check_branch
      %240 = sbr.rel (%p237) target = $region12
    $region11: #{_moe_forward.1} parent=5 // pred_region
      %s241 = ssub.s32 %s19, 1
    $region12: #{_moe_forward.1} parent=5 // pred_fallthru
      _
    %p242 = scmp.lt.s32.totalorder %s19, 5
    // Predicated region
    $region13: #{_moe_forward.1} parent=5 // pred_check
      %p243 = pneg %p242
    $region14: #{_moe_forward.1} parent=5 // pred_check_branch
      %245 = sbr.rel (%p243) target = $region16
    $region15: #{_moe_forward.1} parent=5 // pred_region
      // Predicated region
      $region17: #{_moe_forward.1} parent=15 // pred_check
        %p246 = pneg %p51
      $region18: #{_moe_forward.1} parent=15 // pred_check_branch
        %248 = sbr.rel (%p246) target = $region20
      $region19: #{_moe_forward.1} parent=15 // pred_region
        %s249 = smul.u32 4, %s26
        %p250 = scmp.lt.s32.totalorder %s249, 19
        %s251 = scalar_select %p250, %s249, 19
        %s252 = smul.addr %s251, 4
        %s253 = scalar_lea.vmem %s1, %s252
        %s254 = smul.u32 4, %s26
      $region20: #{_moe_forward.1} parent=15 // pred_fallthru
        _
      // Predicated region
      $region21: #{_moe_forward.1} parent=15 // pred_check
        %p255 = pneg %p77
      $region22: #{_moe_forward.1} parent=15 // pred_check_branch
        %257 = sbr.rel (%p255) target = $region24
      $region23: #{_moe_forward.1} parent=15 // pred_region
        %s258 = smul.u32 4, %s26
        %p259 = scmp.lt.s32.totalorder %s258, 19
        %s260 = scalar_select %p259, %s258, 19
        %s261 = smul.addr %s260, 8
        %s262 = scalar_lea.vmem %s2, %s261
        %s263 = smul.u32 4, %s26
      $region24: #{_moe_forward.1} parent=15 // pred_fallthru
        _
      // Predicated region
      $region25: #{_moe_forward.1} parent=15 // pred_check
        %p264 = pneg %p107
      $region26: #{_moe_forward.1} parent=15 // pred_check_branch
        %266 = sbr.rel (%p264) target = $region28
      $region27: #{_moe_forward.1} parent=15 // pred_region
        %s267 = sld [smem:[#allocation3 + %s26]]
        %p268 = scmp.lt.s32.totalorder %s267, 3
        %s269 = scalar_select %p268, %s267, 3
        %p270 = scmp.lt.s32.totalorder %s27, 0
        %s271 = scalar_select %p270, %s27, 0
        %s272 = smul.addr %s269, 16
        %s273 = sadd.s32 %s271, %s272
        %s274 = smul.addr %s273, 4
        %s275 = scalar_lea.vmem %s3, %s274
        %s276 = sld [smem:[#allocation3 + %s26]]
      $region28: #{_moe_forward.1} parent=15 // pred_fallthru
        _
      // Predicated region
      $region29: #{_moe_forward.1} parent=15 // pred_check
        %p277 = pneg %p137
      $region30: #{_moe_forward.1} parent=15 // pred_check_branch
        %279 = sbr.rel (%p277) target = $region32
      $region31: #{_moe_forward.1} parent=15 // pred_region
        %s280 = sld [smem:[#allocation3 + %s26]]
        %p281 = scmp.lt.s32.totalorder %s280, 3
        %s282 = scalar_select %p281, %s280, 3
        %p283 = scmp.lt.s32.totalorder %s27, 0
        %s284 = scalar_select %p283, %s27, 0
        %s285 = sadd.s32 %s284, %s282
        %s286 = scalar_lea.vmem %s4, %s285
        %s287 = sld [smem:[#allocation3 + %s26]]
      $region32: #{_moe_forward.1} parent=15 // pred_fallthru
        _
      // Predicated region
      $region33: #{_moe_forward.1} parent=15 // pred_check
        %p288 = pneg %p167
      $region34: #{_moe_forward.1} parent=15 // pred_check_branch
        %290 = sbr.rel (%p288) target = $region36
      $region35: #{_moe_forward.1} parent=15 // pred_region
        %s291 = sld [smem:[#allocation3 + %s26]]
        %s292 = smul.u32 16, %s27
        %p293 = scmp.lt.s32.totalorder %s291, 3
        %s294 = scalar_select %p293, %s291, 3
        %p295 = scmp.lt.s32.totalorder %s292, 15
        %s296 = scalar_select %p295, %s292, 15
        %s297 = smul.addr %s294, 16
        %s298 = sadd.s32 %s296, %s297
        %s299 = smul.addr %s298, 4
        %s300 = scalar_lea.vmem %s5, %s299
        %s301 = sld [smem:[#allocation3 + %s26]]
        %s302 = smul.u32 16, %s27
      $region36: #{_moe_forward.1} parent=15 // pred_fallthru
        _
      // Predicated region
      $region37: #{_moe_forward.1} parent=15 // pred_check
        %p303 = pneg %p195
      $region38: #{_moe_forward.1} parent=15 // pred_check_branch
        %305 = sbr.rel (%p303) target = $region40
      $region39: #{_moe_forward.1} parent=15 // pred_region
        %s306 = sld [smem:[#allocation3 + %s26]]
        %p307 = scmp.lt.s32.totalorder %s306, 3
        %s308 = scalar_select %p307, %s306, 3
        %s309 = scalar_lea.vmem %s6, %s308
        %s310 = sld [smem:[#allocation3 + %s26]]
      $region40: #{_moe_forward.1} parent=15 // pred_fallthru
        _
    $region16: #{_moe_forward.1} parent=5 // pred_fallthru
      _
    %p311 = scmp.le.s32.totalorder 1, %s19
    %p312 = scmp.lt.s32.totalorder %s19, 6
    %p313 = pnand %p311, %p312
    %p314 = pneg %p313
    // Predicated region
    $region41: #{_moe_forward.1} parent=5 // pred_check
      _
    $region42: #{_moe_forward.1} parent=5 // pred_check_branch
      %316 = sbr.rel (%p313) target = $region44
    $region43: #{_moe_forward.1} parent=5 // pred_region
      %s317 = ssub.s32 %s19, 1
      %s318 = smul.u32 4, %s28
      %p319 = scmp.lt.s32.totalorder %s318, 19
      %s320 = scalar_select %p319, %s318, 19
      %s321 = smul.addr %s320, 4
      %s322 = scalar_lea.vmem %s1, %s321
      %p323 = pneg %p57
      %p324 = pneg %p54
      %s325 = smul.u32 4, %s28
      %p326 = scmp.lt.s32.totalorder %s325, 19
      %s327 = scalar_select %p326, %s325, 19
      %s328 = smul.addr %s327, 8
      %s329 = scalar_lea.vmem %s2, %s328
      %p330 = pneg %p83
      %p331 = pneg %p80
      %s332 = sld [smem:[#allocation3 + %s28]]
      %p333 = scmp.lt.s32.totalorder %s332, 3
      %s334 = scalar_select %p333, %s332, 3
      %p335 = scmp.lt.s32.totalorder %s29, 0
      %s336 = scalar_select %p335, %s29, 0
      %s337 = smul.addr %s334, 16
      %s338 = sadd.s32 %s336, %s337
      %s339 = smul.addr %s338, 4
      %s340 = scalar_lea.vmem %s3, %s339
      %p341 = pneg %p113
      %p342 = pneg %p110
      %s343 = sld [smem:[#allocation3 + %s28]]
      %p344 = scmp.lt.s32.totalorder %s343, 3
      %s345 = scalar_select %p344, %s343, 3
      %p346 = scmp.lt.s32.totalorder %s29, 0
      %s347 = scalar_select %p346, %s29, 0
      %s348 = sadd.s32 %s347, %s345
      %s349 = scalar_lea.vmem %s4, %s348
      %p350 = pneg %p143
      %p351 = pneg %p140
      %s352 = sld [smem:[#allocation3 + %s28]]
      %s353 = smul.u32 16, %s29
      %p354 = scmp.lt.s32.totalorder %s352, 3
      %s355 = scalar_select %p354, %s352, 3
      %p356 = scmp.lt.s32.totalorder %s353, 15
      %s357 = scalar_select %p356, %s353, 15
      %s358 = smul.addr %s355, 16
      %s359 = sadd.s32 %s357, %s358
      %s360 = smul.addr %s359, 4
      %s361 = scalar_lea.vmem %s5, %s360
      %p362 = pneg %p173
      %p363 = pneg %p170
      %s364 = sld [smem:[#allocation3 + %s28]]
      %p365 = scmp.lt.s32.totalorder %s364, 3
      %s366 = scalar_select %p365, %s364, 3
      %s367 = scalar_lea.vmem %s6, %s366
      %p368 = pneg %p201
      %p369 = pneg %p198
      %p370 = pneg %p227
      %p371 = pneg %p224
      %s372 = smul.u32 4, %s28
      %p373 = scmp.lt.s32.totalorder %s372, 19
      %s374 = scalar_select %p373, %s372, 19
      %s375 = smul.addr %s374, 8
      %s376 = scalar_lea.vmem %s7, %s375
      %s377 = smul.u32 4, %s28
      %p378 = scmp.lt.s32.totalorder %s377, 19
      %s379 = scalar_select %p378, %s377, 19
      %s380 = smul.addr %s379, 4
      %s381 = scalar_lea.vmem %s1, %s380
      %s382 = smul.u32 4, %s28
      %s383 = smul.u32 4, %s28
      %p384 = scmp.lt.s32.totalorder %s383, 19
      %s385 = scalar_select %p384, %s383, 19
      %s386 = smul.addr %s385, 8
      %s387 = scalar_lea.vmem %s2, %s386
      %s388 = smul.u32 4, %s28
      %s389 = sld [smem:[#allocation3 + %s28]]
      %p390 = scmp.lt.s32.totalorder %s389, 3
      %s391 = scalar_select %p390, %s389, 3
      %p392 = scmp.lt.s32.totalorder %s29, 0
      %s393 = scalar_select %p392, %s29, 0
      %s394 = smul.addr %s391, 16
      %s395 = sadd.s32 %s393, %s394
      %s396 = smul.addr %s395, 4
      %s397 = scalar_lea.vmem %s3, %s396
      %s398 = sld [smem:[#allocation3 + %s28]]
      %s399 = sld [smem:[#allocation3 + %s28]]
      %p400 = scmp.lt.s32.totalorder %s399, 3
      %s401 = scalar_select %p400, %s399, 3
      %p402 = scmp.lt.s32.totalorder %s29, 0
      %s403 = scalar_select %p402, %s29, 0
      %s404 = sadd.s32 %s403, %s401
      %s405 = scalar_lea.vmem %s4, %s404
      %s406 = sld [smem:[#allocation3 + %s28]]
      %s407 = sld [smem:[#allocation3 + %s28]]
      %s408 = smul.u32 16, %s29
      %p409 = scmp.lt.s32.totalorder %s407, 3
      %s410 = scalar_select %p409, %s407, 3
      %p411 = scmp.lt.s32.totalorder %s408, 15
      %s412 = scalar_select %p411, %s408, 15
      %s413 = smul.addr %s410, 16
      %s414 = sadd.s32 %s412, %s413
      %s415 = smul.addr %s414, 4
      %s416 = scalar_lea.vmem %s5, %s415
      %s417 = sld [smem:[#allocation3 + %s28]]
      %s418 = smul.u32 16, %s29
      %s419 = sld [smem:[#allocation3 + %s28]]
      %p420 = scmp.lt.s32.totalorder %s419, 3
      %s421 = scalar_select %p420, %s419, 3
      %s422 = scalar_lea.vmem %s6, %s421
      %s423 = sld [smem:[#allocation3 + %s28]]
      %s424 = smul.u32 4, %s28
      %p425 = scmp.lt.s32.totalorder %s424, 19
      %s426 = scalar_select %p425, %s424, 19
      %s427 = smul.addr %s426, 8
      %s428 = scalar_lea.vmem %s7, %s427
      %s429 = smul.u32 4, %s28
      %p431 = scmp.eq.s32.totalorder %s29, 0
      // Predicated region
      $region45: #{_moe_forward.1} parent=43 // pred_check
        %p432 = pneg %p431
      $region46: #{_moe_forward.1} parent=43 // pred_check_branch
        %434 = sbr.rel (%p432) target = $region48
      $region47: #{_moe_forward.1} parent=43 // pred_region
        %435 = vst [vmem:[%s428] sm:$0xff] 0.0
        %436 = vst [vmem:[%s428 + $0x8] sm:$0xff] 0.0
        %437 = vst [vmem:[%s428 + $0x10] sm:$0xff] 0.0
        %438 = vst [vmem:[%s428 + $0x18] sm:$0xff] 0.0
      $region48: #{_moe_forward.1} parent=43 // pred_fallthru
        _
      %v439 = vld [vmem:[%s381] sm:$0xf]
      %v440 = vld [vmem:[%s381 + $0x4] sm:$0xf]
      %v441 = vld [vmem:[%s381 + $0x8] sm:$0xf]
      %v442 = vld [vmem:[%s381 + $0xc] sm:$0xf]
      %v443 = vld [vmem:[%s397] sm:$0xf]
      %v444 = vld [vmem:[%s397 + $0x4] sm:$0xf]
      %v445 = vld [vmem:[%s397 + $0x8] sm:$0xf]
      %v446 = vld [vmem:[%s397 + $0xc] sm:$0xf]
      %v447 = vld [vmem:[%s397 + $0x10] sm:$0xf]
      %v448 = vld [vmem:[%s397 + $0x14] sm:$0xf]
      %v449 = vld [vmem:[%s397 + $0x18] sm:$0xf]
      %v450 = vld [vmem:[%s397 + $0x1c] sm:$0xf]
      %v451 = vld [vmem:[%s397 + $0x20] sm:$0xf]
      %v452 = vld [vmem:[%s397 + $0x24] sm:$0xf]
      %v453 = vld [vmem:[%s397 + $0x28] sm:$0xf]
      %v454 = vld [vmem:[%s397 + $0x2c] sm:$0xf]
      %v455 = vld [vmem:[%s397 + $0x30] sm:$0xf]
      %v456 = vld [vmem:[%s397 + $0x34] sm:$0xf]
      %v457 = vld [vmem:[%s397 + $0x38] sm:$0xf]
      %v458 = vld [vmem:[%s397 + $0x3c] sm:$0xf]
      %v459 = vld [vmem:[%s405] sm:$0x1]
      %v461 = vlaneseq
      %v462 = vshrl.u32 %v461, 7
      %v463 = vsub.s32 0, %v462
      %v464 = vrot.slane %v459, %v463
      %v470 = vunpack.c.l.b16 %v439
      %v471 = vunpack.c.l.b16 %v440
      %v472 = vunpack.c.l.b16 %v441
      %v473 = vunpack.c.l.b16 %v442
      %v474 = vpack.c.b16 %v471, %v470
      %v475 = vpack.c.b16 %v473, %v472
      %v494 = vunpack.c.l.b16 %v443
      %v495 = vunpack.c.l.b16 %v444
      %v496 = vunpack.c.l.b16 %v445
      %v497 = vunpack.c.l.b16 %v446
      %v498 = vunpack.c.l.b16 %v447
      %v499 = vunpack.c.l.b16 %v448
      %v500 = vunpack.c.l.b16 %v449
      %v501 = vunpack.c.l.b16 %v450
      %v502 = vunpack.c.l.b16 %v451
      %v503 = vunpack.c.l.b16 %v452
      %v504 = vunpack.c.l.b16 %v453
      %v505 = vunpack.c.l.b16 %v454
      %v506 = vunpack.c.l.b16 %v455
      %v507 = vunpack.c.l.b16 %v456
      %v508 = vunpack.c.l.b16 %v457
      %v509 = vunpack.c.l.b16 %v458
      %v510 = vpack.c.b16 %v495, %v494
      %v511 = vpack.c.b16 %v497, %v496
      %v512 = vpack.c.b16 %v499, %v498
      %v513 = vpack.c.b16 %v501, %v500
      %v514 = vpack.c.b16 %v503, %v502
      %v515 = vpack.c.b16 %v505, %v504
      %v516 = vpack.c.b16 %v507, %v506
      %v517 = vpack.c.b16 %v509, %v508
      %526 = vmatprep.subr.bf16.mxu0 0
      %527 = vmatpush1.bf16.msra.mxu0 %v517
      %528 = vmatprep.subr.bf16.mxu0 0
      %529 = vmatpush1.bf16.msra.mxu0 %v516
      %530 = vmatprep.subr.bf16.mxu0 0
      %531 = vmatpush1.bf16.msra.mxu0 %v515
      %532 = vmatprep.subr.bf16.mxu0 0
      %533 = vmatpush1.bf16.msra.mxu0 %v514
      %534 = vmatprep.subr.bf16.mxu0 0
      %535 = vmatpush1.bf16.msra.mxu0 %v513
      %536 = vmatprep.subr.bf16.mxu0 0
      %537 = vmatpush1.bf16.msra.mxu0 %v512
      %538 = vmatprep.subr.bf16.mxu0 0
      %539 = vmatpush1.bf16.msra.mxu0 %v511
      %540 = vmatprep.subr.bf16.mxu0 0
      %541 = vmatpush1.bf16.msra.mxu0 %v510
      %542 = vmatprep.subr.bf16.mxu0 0
      %543 = vmatpush2.bf16.msra.mxu0 0
      %544 = vmatprep.subr.bf16.mxu0 0
      %545 = vmatpush2.bf16.msra.mxu0 0
      %546 = vmatprep.subr.bf16.mxu0 0
      %547 = vmatpush2.bf16.msra.mxu0 0
      %548 = vmatprep.subr.bf16.mxu0 0
      %549 = vmatpush2.bf16.msra.mxu0 0
      %550 = vmatprep.subr.bf16.mxu0 0
      %551 = vmatpush2.bf16.msra.mxu0 0
      %552 = vmatprep.subr.bf16.mxu0 0
      %553 = vmatpush2.bf16.msra.mxu0 0
      %554 = vmatprep.subr.bf16.mxu0 0
      %555 = vmatpush2.bf16.msra.mxu0 0
      %556 = vmatprep.subr.bf16.mxu0 0
      %557 = vmatpush2.bf16.msra.mxu0 0
      %558 = vmatprep.mubr.bf16.mxu0 0
      %559 = vmatmul.mubr.bf16.gmra.mxu0 %v474
      %v560 = vpop.f32.mrf.mxu0
      %v561 = vadd.f32 %v464, %v560
      %v562 = vpop.f32.mrf.mxu0
      %v563 = vpop.f32.mrf.mxu0
      %v564 = vadd.f32 %v464, %v563
      %v565 = vpop.f32.mrf.mxu0
      %566 = vmatprep.mubr.bf16.mxu0 0
      %567 = vmatmul.mubr.bf16.gmra.mxu0 %v475
      %v568 = vpop.f32.mrf.mxu0
      %v569 = vadd.f32 %v464, %v568
      %v570 = vpop.f32.mrf.mxu0
      %v571 = vpop.f32.mrf.mxu0
      %v572 = vadd.f32 %v464, %v571
      %v573 = vpop.f32.mrf.mxu0
      %574 = vdwg.mxu0
      %v575 = vmax.f32 %v561, 0.0
      %v576 = vmax.f32 %v564, 0.0
      %v577 = vmax.f32 %v569, 0.0
      %v578 = vmax.f32 %v572, 0.0
      %v579 = vld [vmem:[%s428] sm:$0xff]
      %v580 = vld [vmem:[%s428 + $0x8] sm:$0xff]
      %v581 = vld [vmem:[%s428 + $0x10] sm:$0xff]
      %v582 = vld [vmem:[%s428 + $0x18] sm:$0xff]
      %v583 = vpack.c.bf16 %v576, %v575
      %v584 = vpack.c.bf16 %v578, %v577
      %v585 = vld [vmem:[%s416] sm:$0xf]
      %v586 = vld [vmem:[%s416 + $0x4] sm:$0xf]
      %v587 = vld [vmem:[%s416 + $0x8] sm:$0xf]
      %v588 = vld [vmem:[%s416 + $0xc] sm:$0xf]
      %v589 = vld [vmem:[%s416 + $0x10] sm:$0xf]
      %v590 = vld [vmem:[%s416 + $0x14] sm:$0xf]
      %v591 = vld [vmem:[%s416 + $0x18] sm:$0xf]
      %v592 = vld [vmem:[%s416 + $0x1c] sm:$0xf]
      %v593 = vld [vmem:[%s416 + $0x20] sm:$0xf]
      %v594 = vld [vmem:[%s416 + $0x24] sm:$0xf]
      %v595 = vld [vmem:[%s416 + $0x28] sm:$0xf]
      %v596 = vld [vmem:[%s416 + $0x2c] sm:$0xf]
      %v597 = vld [vmem:[%s416 + $0x30] sm:$0xf]
      %v598 = vld [vmem:[%s416 + $0x34] sm:$0xf]
      %v599 = vld [vmem:[%s416 + $0x38] sm:$0xf]
      %v600 = vld [vmem:[%s416 + $0x3c] sm:$0xf]
      %v617 = vunpack.c.l.b16 %v585
      %v618 = vunpack.c.l.b16 %v586
      %v619 = vunpack.c.l.b16 %v587
      %v620 = vunpack.c.l.b16 %v588
      %v621 = vunpack.c.l.b16 %v589
      %v622 = vunpack.c.l.b16 %v590
      %v623 = vunpack.c.l.b16 %v591
      %v624 = vunpack.c.l.b16 %v592
      %v625 = vunpack.c.l.b16 %v593
      %v626 = vunpack.c.l.b16 %v594
      %v627 = vunpack.c.l.b16 %v595
      %v628 = vunpack.c.l.b16 %v596
      %v629 = vunpack.c.l.b16 %v597
      %v630 = vunpack.c.l.b16 %v598
      %v631 = vunpack.c.l.b16 %v599
      %v632 = vunpack.c.l.b16 %v600
      %v633 = vpack.c.b16 %v618, %v617
      %v634 = vpack.c.b16 %v620, %v619
      %v635 = vpack.c.b16 %v622, %v621
      %v636 = vpack.c.b16 %v624, %v623
      %v637 = vpack.c.b16 %v626, %v625
      %v638 = vpack.c.b16 %v628, %v627
      %v639 = vpack.c.b16 %v630, %v629
      %v640 = vpack.c.b16 %v632, %v631
      %649 = vmatprep.subr.bf16.mxu0 0
      %650 = vmatpush1.bf16.msra.mxu0 %v640
      %651 = vmatprep.subr.bf16.mxu0 0
      %652 = vmatpush1.bf16.msra.mxu0 %v639
      %653 = vmatprep.subr.bf16.mxu0 0
      %654 = vmatpush1.bf16.msra.mxu0 %v638
      %655 = vmatprep.subr.bf16.mxu0 0
      %656 = vmatpush1.bf16.msra.mxu0 %v637
      %657 = vmatprep.subr.bf16.mxu0 0
      %658 = vmatpush1.bf16.msra.mxu0 %v636
      %659 = vmatprep.subr.bf16.mxu0 0
      %660 = vmatpush1.bf16.msra.mxu0 %v635
      %661 = vmatprep.subr.bf16.mxu0 0
      %662 = vmatpush1.bf16.msra.mxu0 %v634
      %663 = vmatprep.subr.bf16.mxu0 0
      %664 = vmatpush1.bf16.msra.mxu0 %v633
      %665 = vmatprep.subr.bf16.mxu0 0
      %666 = vmatpush2.bf16.msra.mxu0 0
      %667 = vmatprep.subr.bf16.mxu0 0
      %668 = vmatpush2.bf16.msra.mxu0 0
      %669 = vmatprep.subr.bf16.mxu0 0
      %670 = vmatpush2.bf16.msra.mxu0 0
      %671 = vmatprep.subr.bf16.mxu0 0
      %672 = vmatpush2.bf16.msra.mxu0 0
      %673 = vmatprep.subr.bf16.mxu0 0
      %674 = vmatpush2.bf16.msra.mxu0 0
      %675 = vmatprep.subr.bf16.mxu0 0
      %676 = vmatpush2.bf16.msra.mxu0 0
      %677 = vmatprep.subr.bf16.mxu0 0
      %678 = vmatpush2.bf16.msra.mxu0 0
      %679 = vmatprep.subr.bf16.mxu0 0
      %680 = vmatpush2.bf16.msra.mxu0 0
      %681 = vmatprep.mubr.bf16.mxu0 0
      %682 = vmatmul.mubr.bf16.gmra.mxu0 %v583
      %v683 = vpop.f32.mrf.mxu0
      %v684 = vadd.f32 0.0, %v683
      %v685 = vpop.f32.mrf.mxu0
      %v686 = vpop.f32.mrf.mxu0
      %v687 = vadd.f32 0.0, %v686
      %v688 = vpop.f32.mrf.mxu0
      %689 = vmatprep.mubr.bf16.mxu0 0
      %690 = vmatmul.mubr.bf16.gmra.mxu0 %v584
      %v691 = vpop.f32.mrf.mxu0
      %v692 = vadd.f32 0.0, %v691
      %v693 = vpop.f32.mrf.mxu0
      %v694 = vpop.f32.mrf.mxu0
      %v695 = vadd.f32 0.0, %v694
      %v696 = vpop.f32.mrf.mxu0
      %697 = vdwg.mxu0
      %v698 = vadd.f32 %v579, %v684
      %v699 = vadd.f32 %v580, %v687
      %v700 = vadd.f32 %v581, %v692
      %v701 = vadd.f32 %v582, %v695
      %702 = vst [vmem:[%s428] sm:$0xff] %v698
      %703 = vst [vmem:[%s428 + $0x8] sm:$0xff] %v699
      %704 = vst [vmem:[%s428 + $0x10] sm:$0xff] %v700
      %705 = vst [vmem:[%s428 + $0x18] sm:$0xff] %v701
      // Predicated region
      $region49: #{_moe_forward.1} parent=43 // pred_check
        %p706 = pneg %p431
      $region50: #{_moe_forward.1} parent=43 // pred_check_branch
        %708 = sbr.rel (%p706) target = $region52
      $region51: #{_moe_forward.1} parent=43 // pred_region
        %v709 = vld [vmem:[%s387] sm:$0xff]
        %v710 = vld [vmem:[%s387 + $0x8] sm:$0xff]
        %v711 = vld [vmem:[%s387 + $0x10] sm:$0xff]
        %v712 = vld [vmem:[%s387 + $0x18] sm:$0xff]
        %v713 = vld [vmem:[%s428] sm:$0xff]
        %v714 = vld [vmem:[%s428 + $0x8] sm:$0xff]
        %v715 = vld [vmem:[%s428 + $0x10] sm:$0xff]
        %v716 = vld [vmem:[%s428 + $0x18] sm:$0xff]
        %v717 = vld [vmem:[%s422] sm:$0x1]
        %v719 = vlaneseq
        %v720 = vshrl.u32 %v719, 7
        %v721 = vsub.s32 0, %v720
        %v722 = vrot.slane %v717, %v721
        %v724 = vadd.f32 %v713, %v722
        %v725 = vadd.f32 %v714, %v722
        %v726 = vadd.f32 %v715, %v722
        %v727 = vadd.f32 %v716, %v722
        %729 = vset.pattern.permute.xlu0 0
        %730 = vperm.xlu0 %729, %v709
        %v731 = vpop.permute.xlu0 %730
        %734 = vset.pattern.permute.xlu0 0
        %735 = vperm.xlu0 %734, %v710
        %v736 = vpop.permute.xlu0 %735
        %739 = vset.pattern.permute.xlu0 0
        %740 = vperm.xlu0 %739, %v711
        %v741 = vpop.permute.xlu0 %740
        %744 = vset.pattern.permute.xlu0 0
        %745 = vperm.xlu0 %744, %v712
        %v746 = vpop.permute.xlu0 %745
        %v748 = vmul.f32 %v731, %v724
        %v749 = vmul.f32 %v736, %v725
        %v750 = vmul.f32 %v741, %v726
        %v751 = vmul.f32 %v746, %v727
        %752 = vst [vmem:[%s428] sm:$0xff] %v748
        %753 = vst [vmem:[%s428 + $0x8] sm:$0xff] %v749
        %754 = vst [vmem:[%s428 + $0x10] sm:$0xff] %v750
        %755 = vst [vmem:[%s428 + $0x18] sm:$0xff] %v751
      $region52: #{_moe_forward.1} parent=43 // pred_fallthru
        _
      %s756 = smul.u32 4, %s28
      %p757 = scmp.lt.s32.totalorder %s756, 19
      %s758 = scalar_select %p757, %s756, 19
      %s759 = smul.addr %s758, 8
      %s760 = scalar_lea.vmem %s7, %s759
      // Predicated region
      $region53: #{_moe_forward.1} parent=43 // pred_check
        %p761 = pneg %p224
      $region54: #{_moe_forward.1} parent=43 // pred_check_branch
        %763 = sbr.rel (%p761) target = $region56
      $region55: #{_moe_forward.1} parent=43 // pred_region
        %s764 = smul.u32 4, %s28
      $region56: #{_moe_forward.1} parent=43 // pred_fallthru
        _
    $region44: #{_moe_forward.1} parent=5 // pred_fallthru
      _
    %p765 = scmp.le.s32.totalorder 2, %s19
    // Predicated region
    $region57: #{_moe_forward.1} parent=5 // pred_check
      %p766 = pneg %p765
    $region58: #{_moe_forward.1} parent=5 // pred_check_branch
      %768 = sbr.rel (%p766) target = $region60
    $region59: #{_moe_forward.1} parent=5 // pred_region
      %s769 = ssub.s32 %s19, 2
      // Predicated region
      $region61: #{_moe_forward.1} parent=59 // pred_check
        %p770 = pneg %p230
      $region62: #{_moe_forward.1} parent=59 // pred_check_branch
        %772 = sbr.rel (%p770) target = $region64
      $region63: #{_moe_forward.1} parent=59 // pred_region
        %s773 = smul.u32 4, %s30
        %p774 = scmp.lt.s32.totalorder %s773, 19
        %s775 = scalar_select %p774, %s773, 19
        %s776 = smul.addr %s775, 8
        %s777 = scalar_lea.vmem %s7, %s776
      $region64: #{_moe_forward.1} parent=59 // pred_fallthru
        _
    $region60: #{_moe_forward.1} parent=5 // pred_fallthru
      _
  $region6: #{_moe_forward.1} parent=0 // loop_footer
    %s23 = sadd.s32 1, %s19
  $region7: #{_moe_forward.1} parent=0 // loop_footer_branch
    %18 = sbr.rel target = $region3
  $region8: #{_moe_forward.1} parent=0 // loop_exit
    _

</llo_original>
